<compile_context>
chip_gen: v7x
topology: tpu7x:2x2x1
jax: 0.10.0
libtpu: 0.0.40
codegen_flags: <defaults>
</compile_context>

<pallas_src>
import functools

import jax
import jax.numpy as jnp
from jax.experimental import pallas as pl
from jax.experimental.pallas import tpu as pltpu


def _round_up(x, m):
    return (x + m - 1) // m * m


def _decoder_kernel(z_ref, w1_ref, w2_ref, w3_ref, b_ref, out_ref, *,
                    h1, h2, out_f):
    """Fused MLP decoder on one batch tile:
       LeakyReLU(z @ W1 + b1) -> LeakyReLU(@ W2 + b2) -> (@ W3 + b3)."""
    z = z_ref[...]

    # Layer 1: bf16 MXU matmul, fp32 accumulate.
    a1 = jnp.dot(z.astype(jnp.bfloat16), w1_ref[...],
                 preferred_element_type=jnp.float32)
    a1 = a1 + b_ref[:, 0:h1]
    a1 = jnp.maximum(a1, 0.01 * a1)          # LeakyReLU(0.01)

    # Layer 2
    a2 = jnp.dot(a1.astype(jnp.bfloat16), w2_ref[...],
                 preferred_element_type=jnp.float32)
    a2 = a2 + b_ref[:, h1:h1 + h2]
    a2 = jnp.maximum(a2, 0.01 * a2)          # LeakyReLU(0.01)

    # Output layer (linear)
    o = jnp.dot(a2.astype(jnp.bfloat16), w3_ref[...],
                preferred_element_type=jnp.float32)
    o = o + b_ref[:, h1 + h2:h1 + h2 + out_f]

    out_ref[...] = o.astype(out_ref.dtype)


def wasserstein_ae_forward(z, params, *, tile_batch=512):
    """Equivalent of UnsupervisedWassersteinAE.forward(z) = self.decoder(z)."""
    w1, b1, w2, b2, w3, b3 = params
    batch, latent = z.shape
    h1_raw, h2_raw, out_raw = w1.shape[1], w2.shape[1], w3.shape[1]

    # Pad feature dims to lane-aligned multiples of 128 (zero padding is exact:
    # padded activations stay 0 through bias add = 0 and LeakyReLU(0) = 0, and
    # padded output columns are sliced off below).
    h1 = _round_up(h1_raw, 128)
    h2 = _round_up(h2_raw, 128)
    out_f = _round_up(out_raw, 128)

    def pad_w(w, rows, cols):
        return jnp.pad(w, ((0, rows - w.shape[0]), (0, cols - w.shape[1])))

    w1p = pad_w(w1, latent, h1).astype(jnp.bfloat16)
    w2p = pad_w(w2, h1, h2).astype(jnp.bfloat16)
    w3p = pad_w(w3, h2, out_f).astype(jnp.bfloat16)

    # Pack all biases into one array -> single DMA instead of three.
    b_all = jnp.concatenate([
        jnp.pad(b1.reshape(1, -1), ((0, 0), (0, h1 - h1_raw))),
        jnp.pad(b2.reshape(1, -1), ((0, 0), (0, h2 - h2_raw))),
        jnp.pad(b3.reshape(1, -1), ((0, 0), (0, out_f - out_raw))),
    ], axis=1).astype(jnp.float32)

    # Batch tiling: clamp the tile to the 8-aligned batch (so tiny batches
    # don't over-pad), then pad batch to a multiple of the tile.  Per-tile
    # VMEM (double-buffered z + out) is 2*(tb*latent + tb*out_f)*4 B, far
    # below the scoped limit on v5e/v6e (128 MiB) and v7x (64 MiB) for the
    # default tile.
    tb = min(tile_batch, _round_up(batch, 8))
    padded_batch = _round_up(batch, tb)
    zp = jnp.pad(z.astype(jnp.float32), ((0, padded_batch - batch), (0, 0)))

    grid = (padded_batch // tb,)
    resident = lambda shape: pl.BlockSpec(shape, lambda i: tuple(0 for _ in shape))

    kernel = functools.partial(_decoder_kernel, h1=h1, h2=h2, out_f=out_f)

    out = pl.pallas_call(
        kernel,
        out_shape=jax.ShapeDtypeStruct((padded_batch, out_f), jnp.float32),
        grid=grid,
        in_specs=[
            pl.BlockSpec((tb, latent), lambda i: (i, 0)),   # z: tiled over batch
            resident(w1p.shape),                            # weights resident
            resident(w2p.shape),
            resident(w3p.shape),
            resident(b_all.shape),                          # packed biases
        ],
        out_specs=pl.BlockSpec((tb, out_f), lambda i: (i, 0)),
        compiler_params=pltpu.CompilerParams(
            dimension_semantics=("parallel",)),             # megacore on v7x
    )(zp, w1p, w2p, w3p, b_all)

    return out[:batch, :out_raw]


def decoder_reference(z, params):
    """Pure-JAX fp32 reference of the same decoder."""
    w1, b1, w2, b2, w3, b3 = params
    h = z @ w1 + b1
    h = jnp.where(h > 0, h, 0.01 * h)
    h = h @ w2 + b2
    h = jnp.where(h > 0, h, 0.01 * h)
    return h @ w3 + b3


def init_decoder_params(key, latent_dim=8, hidden=(32, 64), out_features=128):
    """Deterministic synthetic decoder parameters (PyTorch-Linear-like init)."""
    dims = (latent_dim,) + tuple(hidden) + (out_features,)
    keys = jax.random.split(key, 2 * (len(dims) - 1))
    params = []
    for idx, (d_in, d_out) in enumerate(zip(dims[:-1], dims[1:])):
        limit = 1.0 / jnp.sqrt(d_in)
        w = jax.random.uniform(keys[2 * idx], (d_in, d_out), jnp.float32,
                               -limit, limit)
        b = jax.random.uniform(keys[2 * idx + 1], (1, d_out), jnp.float32,
                               -limit, limit)
        params.extend([w, b])
    return tuple(params)


if __name__ == "__main__":
    key = jax.random.PRNGKey(0)
    k_params, k_z, k_z2 = jax.random.split(key, 3)

    latent_dim = 8
    batch = 2
    out_features = 128

    params = init_decoder_params(
        k_params, latent_dim=latent_dim, hidden=(32, 64),
        out_features=out_features)

    # Small-batch case (single tile, padded to 8 rows internally).
    z = jax.random.normal(k_z, (batch, latent_dim), dtype=jnp.float32)
    out = jax.block_until_ready(wasserstein_ae_forward(z, params))
    assert out.shape == (batch, out_features), out.shape
    assert jnp.isfinite(out).all()

    ref = decoder_reference(z, params)
    # bf16 weights -> loose tolerance against the fp32 reference.
    assert jnp.allclose(out, ref, rtol=5e-2, atol=5e-2), \
        float(jnp.max(jnp.abs(out - ref)))

    # Multi-tile case (exercises the batch grid + padding path).
    z2 = jax.random.normal(k_z2, (600, latent_dim), dtype=jnp.float32)
    out2 = jax.block_until_ready(
        wasserstein_ae_forward(z2, params, tile_batch=256))
    assert out2.shape == (600, out_features), out2.shape
    ref2 = decoder_reference(z2, params)
    assert jnp.allclose(out2, ref2, rtol=5e-2, atol=5e-2)

    # TODO(synk): encoder side (self.encode) not exercised by forward(); only
    # the decoder hot path is implemented in the Pallas kernel.

    print("KERNEL_OK")
</pallas_src>

<mosaic_0001>
module attributes {stable_mosaic.version = 11 : i64} {
  func.func @_decoder_kernel(%arg0: i32, %arg1: memref<8x8xf32, #tpu.memory_space<vmem>>, %arg2: memref<8x128xbf16, #tpu.memory_space<vmem>>, %arg3: memref<128x128xbf16, #tpu.memory_space<vmem>>, %arg4: memref<128x128xbf16, #tpu.memory_space<vmem>>, %arg5: memref<1x384xf32, #tpu.memory_space<vmem>>, %arg6: memref<8x128xf32, #tpu.memory_space<vmem>>) attributes {dimension_semantics = [#tpu.dimension_semantics<parallel>], iteration_bounds = array<i64: 1>, scalar_prefetch = 0 : i64, scratch_operands = 0 : i64, tpu.core_type = #tpu.core_type<tc>, window_params = [{transform_indices = @transform_0, window_bounds = array<i64: 8, 8>}, {pipeline_mode = #tpu.pipeline_mode<synchronous>, transform_indices = @transform_1, window_bounds = array<i64: 8, 128>}, {pipeline_mode = #tpu.pipeline_mode<synchronous>, transform_indices = @transform_2, window_bounds = array<i64: 128, 128>}, {pipeline_mode = #tpu.pipeline_mode<synchronous>, transform_indices = @transform_3, window_bounds = array<i64: 128, 128>}, {pipeline_mode = #tpu.pipeline_mode<synchronous>, transform_indices = @transform_4, window_bounds = array<i64: 1, 384>}, {transform_indices = @transform_5, window_bounds = array<i64: 8, 128>}]} {
    %c0 = arith.constant 0 : index
    %c0_0 = arith.constant 0 : index
    %0 = vector.load %arg1[%c0, %c0_0] : memref<8x8xf32, #tpu.memory_space<vmem>>, vector<8x8xf32>
    %1 = arith.truncf %0 : vector<8x8xf32> to vector<8x8xbf16>
    %c0_1 = arith.constant 0 : index
    %c0_2 = arith.constant 0 : index
    %2 = vector.load %arg2[%c0_1, %c0_2] : memref<8x128xbf16, #tpu.memory_space<vmem>>, vector<8x128xbf16>
    %cst = arith.constant dense<0.000000e+00> : vector<8x128xf32>
    %3 = tpu.matmul %1, %2, %cst {dimension_numbers = #tpu.dot_dimension_numbers<[1], [0], [0], [1], [0, 0, 1, 1], [], []>} : vector<8x8xbf16>, vector<8x128xbf16>, vector<8x128xf32> -> vector<8x128xf32>
    %c0_3 = arith.constant 0 : index
    %c0_4 = arith.constant 0 : index
    %4 = vector.load %arg5[%c0_3, %c0_4] : memref<1x384xf32, #tpu.memory_space<vmem>>, vector<1x128xf32>
    %5 = vector.broadcast %4 : vector<1x128xf32> to vector<8x128xf32>
    %6 = arith.addf %3, %5 : vector<8x128xf32>
    %cst_5 = arith.constant 0.00999999977 : f32
    %7 = vector.broadcast %cst_5 : f32 to vector<8x128xf32>
    %8 = arith.mulf %7, %6 : vector<8x128xf32>
    %9 = arith.maximumf %6, %8 : vector<8x128xf32>
    %10 = arith.truncf %9 : vector<8x128xf32> to vector<8x128xbf16>
    %c0_6 = arith.constant 0 : index
    %c0_7 = arith.constant 0 : index
    %11 = vector.load %arg3[%c0_6, %c0_7] : memref<128x128xbf16, #tpu.memory_space<vmem>>, vector<128x128xbf16>
    %cst_8 = arith.constant dense<0.000000e+00> : vector<8x128xf32>
    %12 = tpu.matmul %10, %11, %cst_8 {dimension_numbers = #tpu.dot_dimension_numbers<[1], [0], [0], [1], [0, 0, 1, 1], [], []>} : vector<8x128xbf16>, vector<128x128xbf16>, vector<8x128xf32> -> vector<8x128xf32>
    %c0_9 = arith.constant 0 : index
    %c128 = arith.constant 128 : index
    %13 = vector.load %arg5[%c0_9, %c128] : memref<1x384xf32, #tpu.memory_space<vmem>>, vector<1x128xf32>
    %14 = vector.broadcast %13 : vector<1x128xf32> to vector<8x128xf32>
    %15 = arith.addf %12, %14 : vector<8x128xf32>
    %cst_10 = arith.constant 0.00999999977 : f32
    %16 = vector.broadcast %cst_10 : f32 to vector<8x128xf32>
    %17 = arith.mulf %16, %15 : vector<8x128xf32>
    %18 = arith.maximumf %15, %17 : vector<8x128xf32>
    %19 = arith.truncf %18 : vector<8x128xf32> to vector<8x128xbf16>
    %c0_11 = arith.constant 0 : index
    %c0_12 = arith.constant 0 : index
    %20 = vector.load %arg4[%c0_11, %c0_12] : memref<128x128xbf16, #tpu.memory_space<vmem>>, vector<128x128xbf16>
    %cst_13 = arith.constant dense<0.000000e+00> : vector<8x128xf32>
    %21 = tpu.matmul %19, %20, %cst_13 {dimension_numbers = #tpu.dot_dimension_numbers<[1], [0], [0], [1], [0, 0, 1, 1], [], []>} : vector<8x128xbf16>, vector<128x128xbf16>, vector<8x128xf32> -> vector<8x128xf32>
    %c0_14 = arith.constant 0 : index
    %c256 = arith.constant 256 : index
    %22 = vector.load %arg5[%c0_14, %c256] : memref<1x384xf32, #tpu.memory_space<vmem>>, vector<1x128xf32>
    %23 = vector.broadcast %22 : vector<1x128xf32> to vector<8x128xf32>
    %24 = arith.addf %21, %23 : vector<8x128xf32>
    %c0_15 = arith.constant 0 : index
    %c0_16 = arith.constant 0 : index
    %25 = vector.load %arg6[%c0_15, %c0_16] : memref<8x128xf32, #tpu.memory_space<vmem>>, vector<8x128xf32>
    tpu.vector_store %arg6[%c0_15, %c0_16], %24 {strides = array<i32>} : memref<8x128xf32, #tpu.memory_space<vmem>>, vector<8x128xf32>,
    return
  }
  func.func @transform_0(%arg0: i32) -> (i32, i32) {
    %c0_i32 = arith.constant 0 : i32
    %c0_i32_0 = arith.constant 0 : i32
    return %arg0, %c0_i32 : i32, i32
  }
  func.func @transform_1(%arg0: i32) -> (i32, i32) {
    %c0_i32 = arith.constant 0 : i32
    %c0_i32_0 = arith.constant 0 : i32
    %c0_i32_1 = arith.constant 0 : i32
    return %c0_i32, %c0_i32_0 : i32, i32
  }
  func.func @transform_2(%arg0: i32) -> (i32, i32) {
    %c0_i32 = arith.constant 0 : i32
    %c0_i32_0 = arith.constant 0 : i32
    %c0_i32_1 = arith.constant 0 : i32
    return %c0_i32, %c0_i32_0 : i32, i32
  }
  func.func @transform_3(%arg0: i32) -> (i32, i32) {
    %c0_i32 = arith.constant 0 : i32
    %c0_i32_0 = arith.constant 0 : i32
    %c0_i32_1 = arith.constant 0 : i32
    return %c0_i32, %c0_i32_0 : i32, i32
  }
  func.func @transform_4(%arg0: i32) -> (i32, i32) {
    %c0_i32 = arith.constant 0 : i32
    %c0_i32_0 = arith.constant 0 : i32
    %c0_i32_1 = arith.constant 0 : i32
    return %c0_i32, %c0_i32_0 : i32, i32
  }
  func.func @transform_5(%arg0: i32) -> (i32, i32) {
    %c0_i32 = arith.constant 0 : i32
    %c0_i32_0 = arith.constant 0 : i32
    return %arg0, %c0_i32 : i32, i32
  }
}

</mosaic_0001>

<llo_original>
// kernel: tpu_custom_call.1
$region0: #{tpu_custom_call.1}
  #allocation0 [shape = 'u32[]', space=smem, size = 0x4, offset = 0x4, fixed_abs, tag = 'smem constant byte address 0x4 - core index']
  #allocation1 [shape = 'u32[144,128]{1,0:T(1,128)}', space=vmem, size = 0x12000, scoped, tag = 'internal scratch']
  %s0 = inlined_call_operand.hbm [shape: f32[8,8], index: 0, kind: input, shape index: {}]
  %s1 = inlined_call_operand.hbm [shape: bf16[8,128], index: 1, kind: input, shape index: {}]
  %s2 = inlined_call_operand.hbm [shape: bf16[128,128], index: 2, kind: input, shape index: {}]
  %s3 = inlined_call_operand.hbm [shape: bf16[128,128], index: 3, kind: input, shape index: {}]
  %s4 = inlined_call_operand.vmem [shape: f32[1,384], index: 4, kind: input, shape index: {}]
  %s5 = inlined_call_operand.hbm [shape: f32[8,128], index: 5, kind: output, shape index: {}]
  %s6 = sld [smem:[#allocation0]]
  $region46: #{tpu_custom_call.1} parent=0
    _
  %s8 = ssub.s32 1, %s6
  %s9 = scalar_select 0, %s8, %s6
  $region1: #{tpu_custom_call.1} parent=0
    #allocation2 [shape = 'u8[4096]{0}', space=vmem, size = 0x1000, scoped, tag = 'input window, operand 0, single buffered']
    #allocation3 [shape = 's32[1]{0}', space=sflag, size = 0x4, scoped, tag = 'scoped memory for tpu_custom_call.1']
    #allocation4 [shape = 's32[1]{0}', space=sflag, size = 0x4, scoped, tag = 'scoped memory for tpu_custom_call.1']
    #allocation5 [shape = 'u8[2048]{0}', space=vmem, size = 0x800, scoped, tag = 'input window, operand 1, single buffered']
    #allocation6 [shape = 's32[1]{0}', space=sflag, size = 0x4, scoped, tag = 'scoped memory for tpu_custom_call.1']
    #allocation7 [shape = 'u8[32768]{0}', space=vmem, size = 0x8000, scoped, tag = 'input window, operand 2, single buffered']
    #allocation8 [shape = 'u8[32768]{0}', space=vmem, size = 0x8000, scoped, tag = 'input window, operand 3, single buffered']
    #allocation9 [shape = 's32[1]{0}', space=sflag, size = 0x4, scoped, tag = 'scoped memory for tpu_custom_call.1']
    #allocation10 [shape = 'u8[4096]{0}', space=vmem, size = 0x1000, scoped, tag = 'output window, operand 0, single buffered']
    %10 = vsyncpa [#allocation3], 0
    %11 = vsyncpa [#allocation6], 0
    %12 = vsyncpa [#allocation9], 0
    %13 = vsyncpa [#allocation4], 0
    // Predicated region
    $region2: #{tpu_custom_call.1} parent=1 // pred_check
      _
    $region3: #{tpu_custom_call.1} parent=1 // pred_check_branch
      %15 = sbr.rel (0) target = $region5
    $region4: #{tpu_custom_call.1} parent=1 // pred_region
      %s17 = ssub.s32 128, 128
      %18 = vsyncadd [#allocation3], %s17
      %s20 = sshll.u32 [#allocation2], 4
      %s21 = int_to_ptr.vmem [resolvable:$true] %s20
      %23 = dma.hbm_to_vmem [thread:$0]  %s0, 128, %s21, [#allocation3]
    $region5: #{tpu_custom_call.1} parent=1 // pred_fallthru
      _
    // Predicated region
    $region6: #{tpu_custom_call.1} parent=1 // pred_check
      _
    $region7: #{tpu_custom_call.1} parent=1 // pred_check_branch
      %25 = sbr.rel (0) target = $region9
    $region8: #{tpu_custom_call.1} parent=1 // pred_region
      %s27 = ssub.s32 64, 64
      %28 = vsyncadd [#allocation6], %s27
      %s30 = sshll.u32 [#allocation5], 4
      %s31 = int_to_ptr.vmem [resolvable:$true] %s30
      %33 = dma.hbm_to_vmem [thread:$0]  %s1, 64, %s31, [#allocation6]
    $region9: #{tpu_custom_call.1} parent=1 // pred_fallthru
      _
    // Predicated region
    $region10: #{tpu_custom_call.1} parent=1 // pred_check
      _
    $region11: #{tpu_custom_call.1} parent=1 // pred_check_branch
      %35 = sbr.rel (0) target = $region13
    $region12: #{tpu_custom_call.1} parent=1 // pred_region
      %s37 = ssub.s32 1024, 1024
      %38 = vsyncadd [#allocation6], %s37
      %s39 = sshll.u32 [#allocation7], 4
      %s40 = int_to_ptr.vmem [resolvable:$true] %s39
      %45 = dma.hbm_to_vmem [thread:$0]  %s2, 1024, %s40, [#allocation6], 64, 64, 4
    $region13: #{tpu_custom_call.1} parent=1 // pred_fallthru
      _
    // Predicated region
    $region14: #{tpu_custom_call.1} parent=1 // pred_check
      _
    $region15: #{tpu_custom_call.1} parent=1 // pred_check_branch
      %47 = sbr.rel (0) target = $region17
    $region16: #{tpu_custom_call.1} parent=1 // pred_region
      %s49 = ssub.s32 1024, 1024
      %50 = vsyncadd [#allocation9], %s49
      %s51 = sshll.u32 [#allocation8], 4
      %s52 = int_to_ptr.vmem [resolvable:$true] %s51
      %57 = dma.hbm_to_vmem [thread:$0]  %s3, 1024, %s52, [#allocation9], 64, 64, 4
    $region17: #{tpu_custom_call.1} parent=1 // pred_fallthru
      _
    // Predicated region
    $region18: #{tpu_custom_call.1} parent=1 // pred_check
      _
    $region19: #{tpu_custom_call.1} parent=1 // pred_check_branch
      %59 = sbr.rel (0) target = $region21
    $region20: #{tpu_custom_call.1} parent=1 // pred_region
      _
    $region21: #{tpu_custom_call.1} parent=1 // pred_fallthru
      _
    // Predicated region
    $region22: #{tpu_custom_call.1} parent=1 // pred_check
      _
    $region23: #{tpu_custom_call.1} parent=1 // pred_check_branch
      %61 = sbr.rel (0) target = $region25
    $region24: #{tpu_custom_call.1} parent=1 // pred_region
      %62 = dma.done [#allocation3], 128
    $region25: #{tpu_custom_call.1} parent=1 // pred_fallthru
      _
    // Predicated region
    $region26: #{tpu_custom_call.1} parent=1 // pred_check
      _
    $region27: #{tpu_custom_call.1} parent=1 // pred_check_branch
      %64 = sbr.rel (0) target = $region29
    $region28: #{tpu_custom_call.1} parent=1 // pred_region
      %65 = dma.done [#allocation6], 64
    $region29: #{tpu_custom_call.1} parent=1 // pred_fallthru
      _
    // Predicated region
    $region30: #{tpu_custom_call.1} parent=1 // pred_check
      _
    $region31: #{tpu_custom_call.1} parent=1 // pred_check_branch
      %67 = sbr.rel (0) target = $region33
    $region32: #{tpu_custom_call.1} parent=1 // pred_region
      %68 = dma.done [#allocation6], 1024
    $region33: #{tpu_custom_call.1} parent=1 // pred_fallthru
      _
    // Predicated region
    $region34: #{tpu_custom_call.1} parent=1 // pred_check
      _
    $region35: #{tpu_custom_call.1} parent=1 // pred_check_branch
      %70 = sbr.rel (0) target = $region37
    $region36: #{tpu_custom_call.1} parent=1 // pred_region
      %71 = dma.done [#allocation9], 1024
    $region37: #{tpu_custom_call.1} parent=1 // pred_fallthru
      _
    %v73 = vld [vmem:[#allocation2] sm:$0xff]
    %v74 = vpack.c.bf16 %v73, %v73
    %v75 = vld [vmem:[#allocation5] sm:$0xf]
    %v76 = vld [vmem:[%s4] sm:$0x1]
    %v78 = vlaneseq
    %v79 = vshrl.u32 %v78, 7
    %v80 = vsub.s32 0, %v79
    %v81 = vrot.slane %v76, %v80
    %vm83 = vcmask 64512
    %v85 = vsel %vm83, %v74, 0
    %vm87 = vcmask 1043456
    %v89 = vsel %vm87, %v75, 0
    %91 = vmatprep.subr.bf16.mxu0 0
    %92 = vmatpush1.bf16.msra.mxu0 %v89
    %93 = vmatprep.subr.bf16.mxu0 0
    %94 = vmatpush1.bf16.msra.mxu0 0
    %95 = vmatprep.subr.bf16.mxu0 0
    %96 = vmatpush1.bf16.msra.mxu0 0
    %97 = vmatprep.subr.bf16.mxu0 0
    %98 = vmatpush1.bf16.msra.mxu0 0
    %99 = vmatprep.subr.bf16.mxu0 0
    %100 = vmatpush1.bf16.msra.mxu0 0
    %101 = vmatprep.subr.bf16.mxu0 0
    %102 = vmatpush1.bf16.msra.mxu0 0
    %103 = vmatprep.subr.bf16.mxu0 0
    %104 = vmatpush1.bf16.msra.mxu0 0
    %105 = vmatprep.subr.bf16.mxu0 0
    %106 = vmatpush1.bf16.msra.mxu0 0
    %107 = vmatprep.subr.bf16.mxu0 0
    %108 = vmatpush1.bf16.msra.mxu0 0
    %109 = vmatprep.subr.bf16.mxu0 0
    %110 = vmatpush1.bf16.msra.mxu0 0
    %111 = vmatprep.subr.bf16.mxu0 0
    %112 = vmatpush1.bf16.msra.mxu0 0
    %113 = vmatprep.subr.bf16.mxu0 0
    %114 = vmatpush1.bf16.msra.mxu0 0
    %115 = vmatprep.subr.bf16.mxu0 0
    %116 = vmatpush1.bf16.msra.mxu0 0
    %117 = vmatprep.subr.bf16.mxu0 0
    %118 = vmatpush1.bf16.msra.mxu0 0
    %119 = vmatprep.subr.bf16.mxu0 0
    %120 = vmatpush1.bf16.msra.mxu0 0
    %121 = vmatprep.subr.bf16.mxu0 0
    %122 = vmatpush1.bf16.msra.mxu0 0
    %123 = vmatprep.mubr.bf16.mxu0 0
    %124 = vmatmul.mubr.bf16.gmra.mrb[0].mxu0 %v85
    %v125 = vpop.f32.mrb[0].mxu0
    %v126 = vadd.f32 %v81, %v125
    %v127 = vpop.f32.mrb[0].mxu0
    %v128 = vpop.f32.mrb[0].mxu0
    %v129 = vpop.f32.mrb[0].mxu0
    %130 = vdwg.mxu0
    %v131 = vmul.f32 %v126, 0.01
    %v132 = vmax.f32 %v126, %v131
    %v133 = vpack.c.bf16 %v132, %v132
    %v134 = vld [vmem:[#allocation7] sm:$0xf]
    %v135 = vld [vmem:[#allocation7 + $0x4] sm:$0xf]
    %v136 = vld [vmem:[#allocation7 + $0x8] sm:$0xf]
    %v137 = vld [vmem:[#allocation7 + $0xc] sm:$0xf]
    %v138 = vld [vmem:[#allocation7 + $0x10] sm:$0xf]
    %v139 = vld [vmem:[#allocation7 + $0x14] sm:$0xf]
    %v140 = vld [vmem:[#allocation7 + $0x18] sm:$0xf]
    %v141 = vld [vmem:[#allocation7 + $0x1c] sm:$0xf]
    %v142 = vld [vmem:[#allocation7 + $0x20] sm:$0xf]
    %v143 = vld [vmem:[#allocation7 + $0x24] sm:$0xf]
    %v144 = vld [vmem:[#allocation7 + $0x28] sm:$0xf]
    %v145 = vld [vmem:[#allocation7 + $0x2c] sm:$0xf]
    %v146 = vld [vmem:[#allocation7 + $0x30] sm:$0xf]
    %v147 = vld [vmem:[#allocation7 + $0x34] sm:$0xf]
    %v148 = vld [vmem:[#allocation7 + $0x38] sm:$0xf]
    %v149 = vld [vmem:[#allocation7 + $0x3c] sm:$0xf]
    %v150 = vld [vmem:[%s4 + $0x1] sm:$0x1]
    %v152 = vlaneseq
    %v153 = vshrl.u32 %v152, 7
    %v154 = vsub.s32 0, %v153
    %v155 = vrot.slane %v150, %v154
    %v173 = vunpack.c.l.b16 %v134
    %v174 = vunpack.c.l.b16 %v135
    %v175 = vunpack.c.l.b16 %v136
    %v176 = vunpack.c.l.b16 %v137
    %v177 = vunpack.c.l.b16 %v138
    %v178 = vunpack.c.l.b16 %v139
    %v179 = vunpack.c.l.b16 %v140
    %v180 = vunpack.c.l.b16 %v141
    %v181 = vunpack.c.l.b16 %v142
    %v182 = vunpack.c.l.b16 %v143
    %v183 = vunpack.c.l.b16 %v144
    %v184 = vunpack.c.l.b16 %v145
    %v185 = vunpack.c.l.b16 %v146
    %v186 = vunpack.c.l.b16 %v147
    %v187 = vunpack.c.l.b16 %v148
    %v188 = vunpack.c.l.b16 %v149
    %v189 = vpack.c.b16 %v174, %v173
    %v190 = vpack.c.b16 %v176, %v175
    %v191 = vpack.c.b16 %v178, %v177
    %v192 = vpack.c.b16 %v180, %v179
    %v193 = vpack.c.b16 %v182, %v181
    %v194 = vpack.c.b16 %v184, %v183
    %v195 = vpack.c.b16 %v186, %v185
    %v196 = vpack.c.b16 %v188, %v187
    %205 = vmatprep.subr.bf16.mxu0 0
    %206 = vmatpush1.bf16.msra.mxu0 %v189
    %207 = vmatprep.subr.bf16.mxu0 0
    %208 = vmatpush1.bf16.msra.mxu0 %v190
    %209 = vmatprep.subr.bf16.mxu0 0
    %210 = vmatpush1.bf16.msra.mxu0 %v191
    %211 = vmatprep.subr.bf16.mxu0 0
    %212 = vmatpush1.bf16.msra.mxu0 %v192
    %213 = vmatprep.subr.bf16.mxu0 0
    %214 = vmatpush1.bf16.msra.mxu0 %v193
    %215 = vmatprep.subr.bf16.mxu0 0
    %216 = vmatpush1.bf16.msra.mxu0 %v194
    %217 = vmatprep.subr.bf16.mxu0 0
    %218 = vmatpush1.bf16.msra.mxu0 %v195
    %219 = vmatprep.subr.bf16.mxu0 0
    %220 = vmatpush1.bf16.msra.mxu0 %v196
    %221 = vmatprep.subr.bf16.mxu0 0
    %222 = vmatpush1.bf16.msra.mxu0 0
    %223 = vmatprep.subr.bf16.mxu0 0
    %224 = vmatpush1.bf16.msra.mxu0 0
    %225 = vmatprep.subr.bf16.mxu0 0
    %226 = vmatpush1.bf16.msra.mxu0 0
    %227 = vmatprep.subr.bf16.mxu0 0
    %228 = vmatpush1.bf16.msra.mxu0 0
    %229 = vmatprep.subr.bf16.mxu0 0
    %230 = vmatpush1.bf16.msra.mxu0 0
    %231 = vmatprep.subr.bf16.mxu0 0
    %232 = vmatpush1.bf16.msra.mxu0 0
    %233 = vmatprep.subr.bf16.mxu0 0
    %234 = vmatpush1.bf16.msra.mxu0 0
    %235 = vmatprep.subr.bf16.mxu0 0
    %236 = vmatpush1.bf16.msra.mxu0 0
    %237 = vmatprep.mubr.bf16.mxu0 0
    %238 = vmatmul.mubr.bf16.gmra.mrb[0].mxu0 %v133
    %v239 = vpop.f32.mrb[0].mxu0
    %v240 = vadd.f32 %v155, %v239
    %v241 = vpop.f32.mrb[0].mxu0
    %v242 = vpop.f32.mrb[0].mxu0
    %v243 = vpop.f32.mrb[0].mxu0
    %244 = vdwg.mxu0
    %v245 = vmul.f32 %v240, 0.01
    %v246 = vmax.f32 %v240, %v245
    %v247 = vpack.c.bf16 %v246, %v246
    %v248 = vld [vmem:[#allocation8] sm:$0xf]
    %v249 = vld [vmem:[#allocation8 + $0x4] sm:$0xf]
    %v250 = vld [vmem:[#allocation8 + $0x8] sm:$0xf]
    %v251 = vld [vmem:[#allocation8 + $0xc] sm:$0xf]
    %v252 = vld [vmem:[#allocation8 + $0x10] sm:$0xf]
    %v253 = vld [vmem:[#allocation8 + $0x14] sm:$0xf]
    %v254 = vld [vmem:[#allocation8 + $0x18] sm:$0xf]
    %v255 = vld [vmem:[#allocation8 + $0x1c] sm:$0xf]
    %v256 = vld [vmem:[#allocation8 + $0x20] sm:$0xf]
    %v257 = vld [vmem:[#allocation8 + $0x24] sm:$0xf]
    %v258 = vld [vmem:[#allocation8 + $0x28] sm:$0xf]
    %v259 = vld [vmem:[#allocation8 + $0x2c] sm:$0xf]
    %v260 = vld [vmem:[#allocation8 + $0x30] sm:$0xf]
    %v261 = vld [vmem:[#allocation8 + $0x34] sm:$0xf]
    %v262 = vld [vmem:[#allocation8 + $0x38] sm:$0xf]
    %v263 = vld [vmem:[#allocation8 + $0x3c] sm:$0xf]
    %v264 = vld [vmem:[%s4 + $0x2] sm:$0x1]
    %v266 = vlaneseq
    %v267 = vshrl.u32 %v266, 7
    %v268 = vsub.s32 0, %v267
    %v269 = vrot.slane %v264, %v268
    %v287 = vunpack.c.l.b16 %v248
    %v288 = vunpack.c.l.b16 %v249
    %v289 = vunpack.c.l.b16 %v250
    %v290 = vunpack.c.l.b16 %v251
    %v291 = vunpack.c.l.b16 %v252
    %v292 = vunpack.c.l.b16 %v253
    %v293 = vunpack.c.l.b16 %v254
    %v294 = vunpack.c.l.b16 %v255
    %v295 = vunpack.c.l.b16 %v256
    %v296 = vunpack.c.l.b16 %v257
    %v297 = vunpack.c.l.b16 %v258
    %v298 = vunpack.c.l.b16 %v259
    %v299 = vunpack.c.l.b16 %v260
    %v300 = vunpack.c.l.b16 %v261
    %v301 = vunpack.c.l.b16 %v262
    %v302 = vunpack.c.l.b16 %v263
    %v303 = vpack.c.b16 %v288, %v287
    %v304 = vpack.c.b16 %v290, %v289
    %v305 = vpack.c.b16 %v292, %v291
    %v306 = vpack.c.b16 %v294, %v293
    %v307 = vpack.c.b16 %v296, %v295
    %v308 = vpack.c.b16 %v298, %v297
    %v309 = vpack.c.b16 %v300, %v299
    %v310 = vpack.c.b16 %v302, %v301
    %319 = vmatprep.subr.bf16.mxu0 0
    %320 = vmatpush1.bf16.msra.mxu0 %v303
    %321 = vmatprep.subr.bf16.mxu0 0
    %322 = vmatpush1.bf16.msra.mxu0 %v304
    %323 = vmatprep.subr.bf16.mxu0 0
    %324 = vmatpush1.bf16.msra.mxu0 %v305
    %325 = vmatprep.subr.bf16.mxu0 0
    %326 = vmatpush1.bf16.msra.mxu0 %v306
    %327 = vmatprep.subr.bf16.mxu0 0
    %328 = vmatpush1.bf16.msra.mxu0 %v307
    %329 = vmatprep.subr.bf16.mxu0 0
    %330 = vmatpush1.bf16.msra.mxu0 %v308
    %331 = vmatprep.subr.bf16.mxu0 0
    %332 = vmatpush1.bf16.msra.mxu0 %v309
    %333 = vmatprep.subr.bf16.mxu0 0
    %334 = vmatpush1.bf16.msra.mxu0 %v310
    %335 = vmatprep.subr.bf16.mxu0 0
    %336 = vmatpush1.bf16.msra.mxu0 0
    %337 = vmatprep.subr.bf16.mxu0 0
    %338 = vmatpush1.bf16.msra.mxu0 0
    %339 = vmatprep.subr.bf16.mxu0 0
    %340 = vmatpush1.bf16.msra.mxu0 0
    %341 = vmatprep.subr.bf16.mxu0 0
    %342 = vmatpush1.bf16.msra.mxu0 0
    %343 = vmatprep.subr.bf16.mxu0 0
    %344 = vmatpush1.bf16.msra.mxu0 0
    %345 = vmatprep.subr.bf16.mxu0 0
    %346 = vmatpush1.bf16.msra.mxu0 0
    %347 = vmatprep.subr.bf16.mxu0 0
    %348 = vmatpush1.bf16.msra.mxu0 0
    %349 = vmatprep.subr.bf16.mxu0 0
    %350 = vmatpush1.bf16.msra.mxu0 0
    %351 = vmatprep.mubr.bf16.mxu0 0
    %352 = vmatmul.mubr.bf16.gmra.mrb[0].mxu0 %v247
    %v353 = vpop.f32.mrb[0].mxu0
    %v354 = vadd.f32 %v269, %v353
    %v355 = vpop.f32.mrb[0].mxu0
    %v356 = vpop.f32.mrb[0].mxu0
    %v357 = vpop.f32.mrb[0].mxu0
    %358 = vdwg.mxu0
    %359 = vst [vmem:[#allocation10] sm:$0xff] %v354
    // Predicated region
    $region38: #{tpu_custom_call.1} parent=1 // pred_check
      _
    $region39: #{tpu_custom_call.1} parent=1 // pred_check_branch
      %361 = sbr.rel (0) target = $region41
    $region40: #{tpu_custom_call.1} parent=1 // pred_region
      %s363 = ssub.s32 128, 128
      %364 = vsyncadd [#allocation4], %s363
      %s366 = sshll.u32 [#allocation10], 4
      %s367 = int_to_ptr.vmem [resolvable:$true] %s366
      %369 = dma.vmem_to_hbm [thread:$0]  %s367, 128, %s5, [#allocation4]
    $region41: #{tpu_custom_call.1} parent=1 // pred_fallthru
      _
    // Predicated region
    $region42: #{tpu_custom_call.1} parent=1 // pred_check
      _
    $region43: #{tpu_custom_call.1} parent=1 // pred_check_branch
      %371 = sbr.rel (0) target = $region45
    $region44: #{tpu_custom_call.1} parent=1 // pred_region
      %372 = dma.done [#allocation4], 128
    $region45: #{tpu_custom_call.1} parent=1 // pred_fallthru
      _
    %373 = vsyncpa [#allocation3], 1
    %374 = vsyncpa [#allocation6], 1
    %375 = vsyncpa [#allocation9], 1
    %376 = vsyncpa [#allocation4], 1

</llo_original>
